<compile_context>
chip_gen: v5e
topology: v5e:2x2
jax: 0.10.0
libtpu: 0.0.40
codegen_flags: <defaults>
</compile_context>

<pallas_src>
import math
import functools

import numpy as np
import jax
import jax.numpy as jnp
from jax.experimental import pallas as pl
from jax.experimental.pallas import tpu as pltpu

_MASK_VALUE = -1e30  # finite, so a fully-masked row in a kv tile can't produce NaN


def _pick_tile(dim, candidates):
    """Largest candidate that divides `dim`, else the full dim (small shapes)."""
    for c in candidates:
        if c <= dim and dim % c == 0:
            return c
    return dim


# --------------------------------------------------------------------------
# Tiled matmul kernel (q_proj / k_proj / v_proj / o_proj)
# --------------------------------------------------------------------------
def _matmul_kernel(x_ref, w_ref, o_ref, acc_ref):
    # x_ref: (tm, tk)  w_ref: (tn, tk)  -- contract the K axis of both (no w.T)
    @pl.when(pl.program_id(2) == 0)
    def _init():
        acc_ref[...] = jnp.zeros_like(acc_ref)

    acc_ref[...] += jax.lax.dot_general(
        x_ref[...], w_ref[...],
        dimension_numbers=(((1,), (1,)), ((), ())),
        preferred_element_type=jnp.float32)

    @pl.when(pl.program_id(2) == pl.num_programs(2) - 1)
    def _finalize():
        o_ref[...] = acc_ref[...].astype(o_ref.dtype)


def linear(x2d, w, compute_dtype=jnp.float32):
    """x2d: (M, K), w: (N, K) nn.Linear weight.  Returns x2d @ w.T in f32."""
    M, K = x2d.shape
    N, K2 = w.shape
    assert K == K2

    tm = _pick_tile(M, (256, 128))
    tn = _pick_tile(N, (256, 128))
    tk = _pick_tile(K, (512, 256, 128))

    # TODO(synk): in a real model, cast/store the weights in compute_dtype once
    # at init time instead of casting per call.
    x2d = x2d.astype(compute_dtype)
    w = w.astype(compute_dtype)
    itemsize = np.dtype(compute_dtype).itemsize

    cost = pl.CostEstimate(
        flops=2 * M * N * K,
        transcendentals=0,
        bytes_accessed=(M * K + N * K) * itemsize + M * N * 4)

    return pl.pallas_call(
        _matmul_kernel,
        out_shape=jax.ShapeDtypeStruct((M, N), jnp.float32),
        grid=(M // tm, N // tn, K // tk),
        in_specs=[
            pl.BlockSpec((tm, tk), lambda i, j, k: (i, k)),
            pl.BlockSpec((tn, tk), lambda i, j, k: (j, k)),
        ],
        out_specs=pl.BlockSpec((tm, tn), lambda i, j, k: (i, j)),
        scratch_shapes=[pltpu.VMEM((tm, tn), jnp.float32)],
        compiler_params=pltpu.CompilerParams(
            dimension_semantics=("parallel", "parallel", "arbitrary"),
            vmem_limit_bytes=32 * 1024 * 1024),
        cost_estimate=cost,
    )(x2d, w)


# --------------------------------------------------------------------------
# RoPE kernel: applied once per (batch, head, seq-tile).
# K is rotated once per *kv* head here instead of `groups` times inside the
# attention inner loop.
# --------------------------------------------------------------------------
def _rope_kernel(x_ref, cos_ref, sin_ref, o_ref):
    x = x_ref[...]          # (ts, D)
    cos = cos_ref[...]
    sin = sin_ref[...]
    ts, D = x.shape
    half = D // 2
    # rotate_half(x) = concat(-x[:, half:], x[:, :half])  via XLU lane roll
    col = jax.lax.broadcasted_iota(jnp.int32, (ts, D), 1)
    sign = jnp.where(col < half, -1.0, 1.0).astype(x.dtype)
    rotated = pltpu.roll(x, shift=half, axis=1) * sign
    o_ref[...] = x * cos + rotated * sin


def apply_rope(x, cos, sin):
    """x: (B, H, S, D); cos/sin: (S, D)."""
    B, H, S, D = x.shape
    ts = _pick_tile(S, (512, 256, 128))
    return pl.pallas_call(
        _rope_kernel,
        out_shape=jax.ShapeDtypeStruct(x.shape, x.dtype),
        grid=(B, H, S // ts),
        in_specs=[
            pl.BlockSpec((None, None, ts, D), lambda b, h, si: (b, h, si, 0)),
            pl.BlockSpec((ts, D), lambda b, h, si: (si, 0)),
            pl.BlockSpec((ts, D), lambda b, h, si: (si, 0)),
        ],
        out_specs=pl.BlockSpec((None, None, ts, D), lambda b, h, si: (b, h, si, 0)),
        compiler_params=pltpu.CompilerParams(
            dimension_semantics=("parallel", "parallel", "parallel")),
    )(x, cos, sin)


# --------------------------------------------------------------------------
# Flash-style causal attention (online softmax, causal kv-block skipping)
# --------------------------------------------------------------------------
def _flash_attn_kernel(q_ref, k_ref, v_ref, o_ref, m_ref, l_ref, acc_ref,
                       *, scale, tq, tk):
    qi = pl.program_id(2)
    ki = pl.program_id(3)

    @pl.when(ki == 0)
    def _init():
        m_ref[...] = jnp.full_like(m_ref, -jnp.inf)
        l_ref[...] = jnp.zeros_like(l_ref)
        acc_ref[...] = jnp.zeros_like(acc_ref)

    # Skip kv blocks entirely above the causal diagonal (~2x fewer MXU flops).
    @pl.when(ki * tk <= qi * tq + (tq - 1))
    def _compute():
        q = q_ref[...]              # (tq, D)
        k = k_ref[...]              # (tk, D)
        v = v_ref[...]              # (tk, D)

        # scores: contract D of both q and k (no k.T -> no XLU transpose)
        s = jax.lax.dot_general(
            q, k, dimension_numbers=(((1,), (1,)), ((), ())),
            preferred_element_type=jnp.float32) * scale

        row = qi * tq + jax.lax.broadcasted_iota(jnp.int32, (tq, tk), 0)
        col = ki * tk + jax.lax.broadcasted_iota(jnp.int32, (tq, tk), 1)
        s = jnp.where(col <= row, s, _MASK_VALUE)

        m_prev = m_ref[...]
        m_new = jnp.maximum(m_prev, jnp.max(s, axis=-1, keepdims=True))
        alpha = jnp.exp(m_prev - m_new)
        p = jnp.exp(s - m_new)
        l_ref[...] = alpha * l_ref[...] + jnp.sum(p, axis=-1, keepdims=True)
        acc_ref[...] = alpha * acc_ref[...] + jnp.dot(
            p.astype(v.dtype), v, preferred_element_type=jnp.float32)
        m_ref[...] = m_new

    @pl.when(ki == pl.num_programs(3) - 1)
    def _finalize():
        o_ref[...] = (acc_ref[...] *
                      pl.reciprocal(l_ref[...], approx=True)).astype(o_ref.dtype)


def flash_attention(q, k, v, *, num_heads, num_kv_heads, scale):
    """q: (B, Hq, S, D); k, v: (B, Hkv, S, D) (already RoPE'd where needed)."""
    B, Hq, S, D = q.shape
    groups = num_heads // num_kv_heads
    tq = _pick_tile(S, (256, 128))
    tk = _pick_tile(S, (512, 256, 128))
    itemsize = np.dtype(q.dtype).itemsize

    cost = pl.CostEstimate(
        flops=4 * B * Hq * S * S * D,          # QK^T + PV upper bound (causal ~1/2)
        transcendentals=B * Hq * S * S,
        bytes_accessed=(q.size + k.size + v.size) * itemsize + q.size * 4)

    kernel = functools.partial(_flash_attn_kernel, scale=scale, tq=tq, tk=tk)
    return pl.pallas_call(
        kernel,
        out_shape=jax.ShapeDtypeStruct((B, Hq, S, D), jnp.float32),
        grid=(B, Hq, S // tq, S // tk),
        in_specs=[
            pl.BlockSpec((None, None, tq, D), lambda b, h, qi, ki: (b, h, qi, 0)),
            pl.BlockSpec((None, None, tk, D),
                         lambda b, h, qi, ki: (b, h // groups, ki, 0)),
            pl.BlockSpec((None, None, tk, D),
                         lambda b, h, qi, ki: (b, h // groups, ki, 0)),
        ],
        out_specs=pl.BlockSpec((None, None, tq, D),
                               lambda b, h, qi, ki: (b, h, qi, 0)),
        scratch_shapes=[
            pltpu.VMEM((tq, 1), jnp.float32),   # running max m
            pltpu.VMEM((tq, 1), jnp.float32),   # running denom l
            pltpu.VMEM((tq, D), jnp.float32),   # output accumulator
        ],
        compiler_params=pltpu.CompilerParams(
            dimension_semantics=("parallel", "parallel", "parallel", "arbitrary"),
            vmem_limit_bytes=32 * 1024 * 1024),
        cost_estimate=cost,
    )(q, k, v)


# --------------------------------------------------------------------------
# LlamaAttention.prefill forward (the exec_type == 'prompt_prefill' branch)
# --------------------------------------------------------------------------
def llama_attention_prefill(hidden_states, cos, sin, params,
                            num_heads, num_kv_heads, head_dim,
                            compute_dtype=jnp.float32):
    B, S, H = hidden_states.shape
    x2d = hidden_states.reshape(B * S, H)

    # projections (no bias: config.attention_bias = False)
    q = linear(x2d, params["wq"], compute_dtype)     # (B*S, Hq*D)
    k = linear(x2d, params["wk"], compute_dtype)     # (B*S, Hkv*D)
    v = linear(x2d, params["wv"], compute_dtype)     # (B*S, Hkv*D)

    # (B*S, H*D) -> (B, H, S, D) for the per-(batch, head) grids.
    # TODO(synk): with head_dim % 128 == 0 (real Llama), these transposes and
    # the post-attention one can be folded into head-slab BlockSpec index_maps
    # so q/k/v/attn never round-trip HBM in a second layout.
    q = q.reshape(B, S, num_heads, head_dim).transpose(0, 2, 1, 3)
    k = k.reshape(B, S, num_kv_heads, head_dim).transpose(0, 2, 1, 3)
    v = v.reshape(B, S, num_kv_heads, head_dim).transpose(0, 2, 1, 3)

    # RoPE: once per query head for Q, once per *kv* head for K (f32 VPU math).
    q = apply_rope(q, cos, sin)
    k = apply_rope(k, cos, sin)

    # MXU operands may run in bf16 (v6e/v7x); softmax stays f32 in-kernel.
    q = q.astype(compute_dtype)
    k = k.astype(compute_dtype)
    v = v.astype(compute_dtype)

    # TODO(synk): K_cache/V_cache writeback goes to an external kv_cache_manager
    # (use input_output_aliases when added); k (post-RoPE) and v are what would
    # be written.

    # flash_attn_func default softmax scale = head_dim ** -0.5
    scale = 1.0 / math.sqrt(head_dim)
    attn = flash_attention(q, k, v, num_heads=num_heads,
                           num_kv_heads=num_kv_heads, scale=scale)

    # (B, Hq, S, D) -> (B, S, Hq*D) -> o_proj
    attn = attn.transpose(0, 2, 1, 3).reshape(B * S, num_heads * head_dim)
    out = linear(attn, params["wo"], compute_dtype).reshape(B, S, H)
    return out


# --------------------------------------------------------------------------
# Rotary embedding table (position_embeddings input to forward)
# --------------------------------------------------------------------------
def rotary_embedding(positions, head_dim, theta=10000.0):
    inv_freq = 1.0 / (theta ** (jnp.arange(0, head_dim, 2, dtype=jnp.float32) / head_dim))
    freqs = positions.astype(jnp.float32)[:, None] * inv_freq[None, :]   # (S, D/2)
    emb = jnp.concatenate([freqs, freqs], axis=-1)                       # (S, D)
    return jnp.cos(emb), jnp.sin(emb)


# --------------------------------------------------------------------------
# Pure-JAX reference (same math) for a sanity check
# --------------------------------------------------------------------------
def _reference(hidden_states, cos, sin, params, num_heads, num_kv_heads, head_dim):
    B, S, H = hidden_states.shape
    x2d = hidden_states.reshape(B * S, H)
    q = (x2d @ params["wq"].T).reshape(B, S, num_heads, head_dim)
    k = (x2d @ params["wk"].T).reshape(B, S, num_kv_heads, head_dim)
    v = (x2d @ params["wv"].T).reshape(B, S, num_kv_heads, head_dim)

    def rot_half(x):
        return jnp.concatenate([-x[..., head_dim // 2:], x[..., :head_dim // 2]], axis=-1)

    c = cos[None, :, None, :]
    s = sin[None, :, None, :]
    q = q * c + rot_half(q) * s
    k = k * c + rot_half(k) * s

    groups = num_heads // num_kv_heads
    k = jnp.repeat(k, groups, axis=2)
    v = jnp.repeat(v, groups, axis=2)
    q = q.transpose(0, 2, 1, 3)
    k = k.transpose(0, 2, 1, 3)
    v = v.transpose(0, 2, 1, 3)
    scores = jnp.einsum("bhqd,bhkd->bhqk", q, k) / math.sqrt(head_dim)
    mask = jnp.tril(jnp.ones((S, S), dtype=bool))
    scores = jnp.where(mask[None, None], scores, -jnp.inf)
    attn = jax.nn.softmax(scores, axis=-1)
    out = jnp.einsum("bhqk,bhkd->bhqd", attn, v)
    out = out.transpose(0, 2, 1, 3).reshape(B * S, num_heads * head_dim)
    return (out @ params["wo"].T).reshape(B, S, H)


if __name__ == "__main__":
    B, S = 2, 8
    hidden_size = 64
    num_heads = 4
    num_kv_heads = 2
    head_dim = hidden_size // num_heads  # 16

    key = jax.random.PRNGKey(0)
    k0, k1, k2, k3, k4 = jax.random.split(key, 5)

    def init_linear(k, out_f, in_f):
        bound = 1.0 / math.sqrt(in_f)
        return jax.random.uniform(k, (out_f, in_f), jnp.float32, -bound, bound)

    params = {
        "wq": init_linear(k0, num_heads * head_dim, hidden_size),
        "wk": init_linear(k1, num_kv_heads * head_dim, hidden_size),
        "wv": init_linear(k2, num_kv_heads * head_dim, hidden_size),
        "wo": init_linear(k3, hidden_size, num_heads * head_dim),
    }

    hidden_states = jax.random.normal(k4, (B, S, hidden_size), jnp.float32)

    positions = jnp.arange(S)
    cos, sin = rotary_embedding(positions, head_dim)   # (S, D) -- no batch broadcast

    out = llama_attention_prefill(hidden_states, cos, sin, params,
                                  num_heads, num_kv_heads, head_dim,
                                  compute_dtype=jnp.float32)
    out = jax.block_until_ready(out)

    ref = _reference(hidden_states, cos, sin, params,
                     num_heads, num_kv_heads, head_dim)
    assert jnp.allclose(out, ref, atol=1e-2, rtol=1e-2), "mismatch vs reference"

    print("KERNEL_OK")
</pallas_src>

<mosaic_0001>
module attributes {stable_mosaic.version = 11 : i64} {
  func.func @_matmul_kernel(%arg0: i32, %arg1: i32, %arg2: i32, %arg3: memref<16x64xf32, #tpu.memory_space<vmem>>, %arg4: memref<64x64xf32, #tpu.memory_space<vmem>>, %arg5: memref<16x64xf32, #tpu.memory_space<vmem>>, %arg6: memref<16x64xf32, #tpu.memory_space<vmem>>) attributes {dimension_semantics = [#tpu.dimension_semantics<parallel>, #tpu.dimension_semantics<parallel>, #tpu.dimension_semantics<arbitrary>], iteration_bounds = array<i64: 1, 1, 1>, scalar_prefetch = 0 : i64, scratch_operands = 1 : i64, tpu.core_type = #tpu.core_type<tc>, window_params = [{transform_indices = @transform_0, window_bounds = array<i64: 16, 64>}, {transform_indices = @transform_1, window_bounds = array<i64: 64, 64>}, {transform_indices = @transform_2, window_bounds = array<i64: 16, 64>}]} {
    %c0_i32 = arith.constant 0 : i32
    %0 = arith.cmpi eq, %arg2, %c0_i32 : i32
    %1 = arith.extui %0 : i1 to i32
    %c0_i32_0 = arith.constant 0 : i32
    %2 = arith.cmpi ne, %1, %c0_i32_0 : i32
    scf.if %2 {
      %cst_10 = arith.constant 0.000000e+00 : f32
      %12 = vector.broadcast %cst_10 : f32 to vector<16x64xf32>
      %c0_11 = arith.constant 0 : index
      %c0_12 = arith.constant 0 : index
      %13 = vector.load %arg6[%c0_11, %c0_12] : memref<16x64xf32, #tpu.memory_space<vmem>>, vector<16x64xf32>
      tpu.vector_store %arg6[%c0_11, %c0_12], %12 {strides = array<i32>} : memref<16x64xf32, #tpu.memory_space<vmem>>, vector<16x64xf32>,
    } else {
    }
    %c0 = arith.constant 0 : index
    %c0_1 = arith.constant 0 : index
    %3 = vector.load %arg6[%c0, %c0_1] : memref<16x64xf32, #tpu.memory_space<vmem>>, vector<16x64xf32>
    %c0_2 = arith.constant 0 : index
    %c0_3 = arith.constant 0 : index
    %4 = vector.load %arg3[%c0_2, %c0_3] : memref<16x64xf32, #tpu.memory_space<vmem>>, vector<16x64xf32>
    %c0_4 = arith.constant 0 : index
    %c0_5 = arith.constant 0 : index
    %5 = vector.load %arg4[%c0_4, %c0_5] : memref<64x64xf32, #tpu.memory_space<vmem>>, vector<64x64xf32>
    %cst = arith.constant dense<0.000000e+00> : vector<16x64xf32>
    %6 = tpu.matmul %4, %5, %cst {dimension_numbers = #tpu.dot_dimension_numbers<[1], [1], [0], [0], [0, 0, 1, 0], [], []>} : vector<16x64xf32>, vector<64x64xf32>, vector<16x64xf32> -> vector<16x64xf32>
    %7 = arith.addf %3, %6 : vector<16x64xf32>
    %c0_6 = arith.constant 0 : index
    %c0_7 = arith.constant 0 : index
    %8 = vector.load %arg6[%c0_6, %c0_7] : memref<16x64xf32, #tpu.memory_space<vmem>>, vector<16x64xf32>
    tpu.vector_store %arg6[%c0_6, %c0_7], %7 {strides = array<i32>} : memref<16x64xf32, #tpu.memory_space<vmem>>, vector<16x64xf32>,
    %c0_i32_8 = arith.constant 0 : i32
    %9 = arith.cmpi eq, %arg2, %c0_i32_8 : i32
    %10 = arith.extui %9 : i1 to i32
    %c0_i32_9 = arith.constant 0 : i32
    %11 = arith.cmpi ne, %10, %c0_i32_9 : i32
    scf.if %11 {
      %c0_10 = arith.constant 0 : index
      %c0_11 = arith.constant 0 : index
      %12 = vector.load %arg6[%c0_10, %c0_11] : memref<16x64xf32, #tpu.memory_space<vmem>>, vector<16x64xf32>
      %c0_12 = arith.constant 0 : index
      %c0_13 = arith.constant 0 : index
      %13 = vector.load %arg5[%c0_12, %c0_13] : memref<16x64xf32, #tpu.memory_space<vmem>>, vector<16x64xf32>
      tpu.vector_store %arg5[%c0_12, %c0_13], %12 {strides = array<i32>} : memref<16x64xf32, #tpu.memory_space<vmem>>, vector<16x64xf32>,
    } else {
    }
    return
  }
  func.func @transform_0(%arg0: i32, %arg1: i32, %arg2: i32) -> (i32, i32) {
    %c0_i32 = arith.constant 0 : i32
    return %arg0, %arg2 : i32, i32
  }
  func.func @transform_1(%arg0: i32, %arg1: i32, %arg2: i32) -> (i32, i32) {
    %c0_i32 = arith.constant 0 : i32
    return %arg1, %arg2 : i32, i32
  }
  func.func @transform_2(%arg0: i32, %arg1: i32, %arg2: i32) -> (i32, i32) {
    %c0_i32 = arith.constant 0 : i32
    return %arg0, %arg1 : i32, i32
  }
}

</mosaic_0001>

<llo_original>
// kernel: tpu_custom_call.1
$region0: #{tpu_custom_call.1}
  #allocation0 [shape = 'u32[]', space=smem, size = 0x4, offset = 0x4, fixed_abs, tag = 'smem constant byte address 0x4 - core index']
  #allocation1 [shape = 'u32[72,128]{1,0:T(1,128)}', space=vmem, size = 0x9000, scoped, tag = 'internal scratch']
  #allocation2 [shape = 'f32[16,64]{1,0:T(8,128)}', space=vmem, size = 0x2000, scoped, tag = 'scratch operand']
  %s0 = inlined_call_operand.hbm [shape: f32[16,64], index: 0, kind: input, shape index: {}]
  %s1 = inlined_call_operand.hbm [shape: f32[64,64], index: 1, kind: input, shape index: {}]
  %s2 = inlined_call_operand.hbm [shape: f32[16,64], index: 2, kind: output, shape index: {}]
  %s3 = sld [smem:[#allocation0]]
  $region34: #{tpu_custom_call.1} parent=0
    _
  %s5 = ssub.s32 1, %s3
  %s6 = scalar_select 0, %s5, %s3
  $region1: #{tpu_custom_call.1} parent=0
    #allocation3 [shape = 'u8[8192]{0}', space=vmem, size = 0x2000, scoped, tag = 'input window, operand 0, single buffered']
    #allocation4 [shape = 's32[1]{0}', space=sflag, size = 0x4, scoped, tag = 'scoped memory for tpu_custom_call.1']
    #allocation5 [shape = 's32[1]{0}', space=sflag, size = 0x4, scoped, tag = 'scoped memory for tpu_custom_call.1']
    #allocation6 [shape = 'u8[32768]{0}', space=vmem, size = 0x8000, scoped, tag = 'input window, operand 1, single buffered']
    #allocation7 [shape = 's32[1]{0}', space=sflag, size = 0x4, scoped, tag = 'scoped memory for tpu_custom_call.1']
    #allocation8 [shape = 'u8[8192]{0}', space=vmem, size = 0x2000, scoped, tag = 'output window, operand 0, single buffered']
    %7 = vsyncpa [#allocation4], 0
    %8 = vsyncpa [#allocation7], 0
    %9 = vsyncpa [#allocation5], 0
    // Predicated region
    $region2: #{tpu_custom_call.1} parent=1 // pred_check
      _
    $region3: #{tpu_custom_call.1} parent=1 // pred_check_branch
      %11 = sbr.rel (0) target = $region5
    $region4: #{tpu_custom_call.1} parent=1 // pred_region
      %13 = vsyncadd [#allocation4], 0
      %s14 = sshll.u32 %s0, 4
      %s15 = int_to_ptr.hbm [resolvable:$true] %s14
      %s16 = sshll.u32 [#allocation3], 4
      %s17 = int_to_ptr.vmem [resolvable:$true] %s16
      %22 = dma.hbm_to_vmem [thread:$0]  %s15, 256, %s17, [#allocation4], 128, 128, 8
    $region5: #{tpu_custom_call.1} parent=1 // pred_fallthru
      _
    // Predicated region
    $region6: #{tpu_custom_call.1} parent=1 // pred_check
      _
    $region7: #{tpu_custom_call.1} parent=1 // pred_check_branch
      %24 = sbr.rel (0) target = $region9
    $region8: #{tpu_custom_call.1} parent=1 // pred_region
      %26 = vsyncadd [#allocation7], 0
      %s27 = sshll.u32 %s1, 4
      %s28 = int_to_ptr.hbm [resolvable:$true] %s27
      %s29 = sshll.u32 [#allocation6], 4
      %s30 = int_to_ptr.vmem [resolvable:$true] %s29
      %35 = dma.hbm_to_vmem [thread:$0]  %s28, 1024, %s30, [#allocation7], 128, 128, 8
    $region9: #{tpu_custom_call.1} parent=1 // pred_fallthru
      _
    // Predicated region
    $region10: #{tpu_custom_call.1} parent=1 // pred_check
      _
    $region11: #{tpu_custom_call.1} parent=1 // pred_check_branch
      %37 = sbr.rel (0) target = $region13
    $region12: #{tpu_custom_call.1} parent=1 // pred_region
      %39 = dma.done [#allocation4], 256
    $region13: #{tpu_custom_call.1} parent=1 // pred_fallthru
      _
    // Predicated region
    $region14: #{tpu_custom_call.1} parent=1 // pred_check
      _
    $region15: #{tpu_custom_call.1} parent=1 // pred_check_branch
      %41 = sbr.rel (0) target = $region17
    $region16: #{tpu_custom_call.1} parent=1 // pred_region
      %43 = dma.done [#allocation7], 1024
    $region17: #{tpu_custom_call.1} parent=1 // pred_fallthru
      _
    %p44 = scmp.eq.s32.totalorder 0, 0
    // Predicated region
    $region18: #{tpu_custom_call.1} parent=1 // pred_check
      %p45 = pneg %p44
    $region19: #{tpu_custom_call.1} parent=1 // pred_check_branch
      %47 = sbr.rel (%p45) target = $region21
    $region20: #{tpu_custom_call.1} parent=1 // pred_region
      %vm48 = vcmask 523264
      %49 = vst.msk [vmem:[#allocation2] sm:$0xff] %vm48, 0.0
      %50 = vst.msk [vmem:[#allocation2 + $0x8] sm:$0xff] %vm48, 0.0
    $region21: #{tpu_custom_call.1} parent=1 // pred_fallthru
      _
    %v51 = vld [vmem:[#allocation2] sm:$0xff]
    %v52 = vld [vmem:[#allocation2 + $0x8] sm:$0xff]
    %v53 = vld [vmem:[#allocation3] sm:$0xff]
    %v54 = vld [vmem:[#allocation3 + $0x8] sm:$0xff]
    %v55 = vld [vmem:[#allocation6] sm:$0xff]
    %v56 = vld [vmem:[#allocation6 + $0x8] sm:$0xff]
    %v57 = vld [vmem:[#allocation6 + $0x10] sm:$0xff]
    %v58 = vld [vmem:[#allocation6 + $0x18] sm:$0xff]
    %v59 = vld [vmem:[#allocation6 + $0x20] sm:$0xff]
    %v60 = vld [vmem:[#allocation6 + $0x28] sm:$0xff]
    %v61 = vld [vmem:[#allocation6 + $0x30] sm:$0xff]
    %v62 = vld [vmem:[#allocation6 + $0x38] sm:$0xff]
    %vm63 = vcmask 523264
    %v65 = vsel %vm63, %v53, 0
    %v68 = vsel %vm63, %v54, 0
    %v71 = vsel %vm63, %v55, 0
    %v74 = vsel %vm63, %v56, 0
    %v77 = vsel %vm63, %v57, 0
    %v80 = vsel %vm63, %v58, 0
    %v83 = vsel %vm63, %v59, 0
    %v86 = vsel %vm63, %v60, 0
    %v89 = vsel %vm63, %v61, 0
    %v92 = vsel %vm63, %v62, 0
    %94 = vmatpush.xpose.msra.mxu0 0.0
    %95 = vmatpush.xpose.msra.mxu0 0.0
    %96 = vmatpush.xpose.msra.mxu0 0.0
    %97 = vmatpush.xpose.msra.mxu0 0.0
    %98 = vmatpush.xpose.msra.mxu0 0.0
    %99 = vmatpush.xpose.msra.mxu0 0.0
    %100 = vmatpush.xpose.msra.mxu0 0.0
    %101 = vmatpush.xpose.msra.mxu0 0.0
    %102 = vmatpush.xpose.msra.mxu0 %v92
    %103 = vmatpush.xpose.msra.mxu0 %v89
    %104 = vmatpush.xpose.msra.mxu0 %v86
    %105 = vmatpush.xpose.msra.mxu0 %v83
    %106 = vmatpush.xpose.msra.mxu0 %v80
    %107 = vmatpush.xpose.msra.mxu0 %v77
    %108 = vmatpush.xpose.msra.mxu0 %v74
    %109 = vmatpush.xpose.msra.mxu0 %v71
    %110 = vmatmul.f32.gmra.mxu0 %v65
    %v111 = vpop.f32.mrf.mxu0
    %v112 = vadd.f32 0.0, %v111
    %113 = vmatmul.f32.gmra.mxu0 %v68
    %v114 = vpop.f32.mrf.mxu0
    %v115 = vadd.f32 0.0, %v114
    %116 = vdwg.mxu0
    %v117 = vadd.f32 %v51, %v112
    %v118 = vadd.f32 %v52, %v115
    %119 = vst.msk [vmem:[#allocation2] sm:$0xff] %vm63, %v117
    %120 = vst.msk [vmem:[#allocation2 + $0x8] sm:$0xff] %vm63, %v118
    // Predicated region
    $region22: #{tpu_custom_call.1} parent=1 // pred_check
      %p121 = pneg %p44
    $region23: #{tpu_custom_call.1} parent=1 // pred_check_branch
      %123 = sbr.rel (%p121) target = $region25
    $region24: #{tpu_custom_call.1} parent=1 // pred_region
      %v124 = vld [vmem:[#allocation2] sm:$0xff]
      %v125 = vld [vmem:[#allocation2 + $0x8] sm:$0xff]
      %126 = vst.msk [vmem:[#allocation8] sm:$0xff] %vm63, %v124
      %127 = vst.msk [vmem:[#allocation8 + $0x8] sm:$0xff] %vm63, %v125
    $region25: #{tpu_custom_call.1} parent=1 // pred_fallthru
      _
    // Predicated region
    $region26: #{tpu_custom_call.1} parent=1 // pred_check
      _
    $region27: #{tpu_custom_call.1} parent=1 // pred_check_branch
      %129 = sbr.rel (0) target = $region29
    $region28: #{tpu_custom_call.1} parent=1 // pred_region
      %131 = vsyncadd [#allocation5], 0
      %s132 = sshll.u32 [#allocation8], 4
      %s133 = int_to_ptr.vmem [resolvable:$true] %s132
      %s134 = sshll.u32 %s2, 4
      %s135 = int_to_ptr.hbm [resolvable:$true] %s134
      %140 = dma.vmem_to_hbm [thread:$0]  %s133, 256, %s135, [#allocation5], 128, 128, 8
    $region29: #{tpu_custom_call.1} parent=1 // pred_fallthru
      _
    // Predicated region
    $region30: #{tpu_custom_call.1} parent=1 // pred_check
      _
    $region31: #{tpu_custom_call.1} parent=1 // pred_check_branch
      %142 = sbr.rel (0) target = $region33
    $region32: #{tpu_custom_call.1} parent=1 // pred_region
      %144 = dma.done [#allocation5], 256
    $region33: #{tpu_custom_call.1} parent=1 // pred_fallthru
      _
    %145 = vsyncpa [#allocation4], 1
    %146 = vsyncpa [#allocation7], 1
    %147 = vsyncpa [#allocation5], 1

</llo_original>
